<compile_context>
chip_gen: v7x
topology: tpu7x:2x2x1
jax: 0.10.0
libtpu: 0.0.40
codegen_flags: <defaults>
</compile_context>

<pallas_src>
import jax
import jax.numpy as jnp
from jax.experimental import pallas as pl
from jax.experimental.pallas import tpu as pltpu


def concat_relu_kernel(w_ref, x_ref, o_ref):
    # w_ref: (B, Cw*D), x_ref: (B, Cx*D), o_ref: (B, (Cw+Cx)*D)
    nw = w_ref.shape[1]
    # Two lane-range stores into disjoint regions of one lane-dense output
    # tile; no concat temporary, no sublane-masked partial stores.
    o_ref[:, :nw] = jnp.maximum(w_ref[...], 0.0)
    o_ref[:, nw:] = jnp.maximum(x_ref[...], 0.0)


def model_forward(weight, x):
    B, Cw, D = weight.shape
    Bx, Cx, Dx = x.shape
    assert B == Bx and D == Dx

    # Flatten the concat axis onto lanes (row-major, so this is exactly
    # torch.cat(dim=1) after reshaping back).
    w2 = weight.reshape(B, Cw * D)
    x2 = x.reshape(B, Cx * D)

    n_out = (Cw + Cx) * D
    out_shape = jax.ShapeDtypeStruct((B, n_out), x.dtype)

    vmem_spec = pl.BlockSpec(memory_space=pltpu.MemorySpace.VMEM)
    elem_bytes = jnp.dtype(x.dtype).itemsize
    total_elems = B * n_out
    cost = pl.CostEstimate(
        flops=total_elems,                       # one max per output element
        bytes_accessed=2 * total_elems * elem_bytes,  # read all + write all
        transcendentals=0,
    )

    out2 = pl.pallas_call(
        concat_relu_kernel,
        out_shape=out_shape,
        in_specs=[vmem_spec, vmem_spec],
        out_specs=vmem_spec,
        cost_estimate=cost,
    )(w2, x2)

    return out2.reshape(B, Cw + Cx, D)


if __name__ == "__main__":
    key = jax.random.PRNGKey(0)
    kw, kb, kx = jax.random.split(key, 3)

    # Deterministic "parameters" matching the module's __init__ shapes.
    weight = jax.random.normal(kw, (2, 3, 4), dtype=jnp.float32)
    bias = jax.random.normal(kb, (2, 2), dtype=jnp.float32)  # unused in forward
    x = jax.random.normal(kx, (2, 3, 4), dtype=jnp.float32)

    out = model_forward(weight, x)
    out = jax.block_until_ready(out)

    # Cross-check against plain-JAX reference semantics.
    ref = jnp.maximum(jnp.concatenate([weight, x], axis=1), 0.0)
    assert out.shape == (2, 6, 4)
    assert jnp.allclose(out, ref, atol=1e-6), "mismatch vs reference"

    print("KERNEL_OK")
</pallas_src>

<mosaic_0001>
module attributes {stable_mosaic.version = 11 : i64} {
  func.func @concat_relu_kernel(%arg0: memref<2x12xf32, #tpu.memory_space<vmem>>, %arg1: memref<2x12xf32, #tpu.memory_space<vmem>>, %arg2: memref<2x24xf32, #tpu.memory_space<vmem>>) attributes {dimension_semantics = [], scalar_prefetch = 0 : i64, scratch_operands = 0 : i64, tpu.core_type = #tpu.core_type<tc>} {
    %c0 = arith.constant 0 : index
    %c0_0 = arith.constant 0 : index
    %0 = vector.load %arg0[%c0, %c0_0] : memref<2x12xf32, #tpu.memory_space<vmem>>, vector<2x12xf32>
    %cst = arith.constant 0.000000e+00 : f32
    %1 = vector.broadcast %cst : f32 to vector<2x12xf32>
    %2 = arith.maximumf %0, %1 : vector<2x12xf32>
    %c0_1 = arith.constant 0 : index
    %c0_2 = arith.constant 0 : index
    %3 = vector.load %arg2[%c0_1, %c0_2] : memref<2x24xf32, #tpu.memory_space<vmem>>, vector<2x12xf32>
    tpu.vector_store %arg2[%c0_1, %c0_2], %2 {strides = array<i32>} : memref<2x24xf32, #tpu.memory_space<vmem>>, vector<2x12xf32>,
    %c0_3 = arith.constant 0 : index
    %c0_4 = arith.constant 0 : index
    %4 = vector.load %arg1[%c0_3, %c0_4] : memref<2x12xf32, #tpu.memory_space<vmem>>, vector<2x12xf32>
    %cst_5 = arith.constant 0.000000e+00 : f32
    %5 = vector.broadcast %cst_5 : f32 to vector<2x12xf32>
    %6 = arith.maximumf %4, %5 : vector<2x12xf32>
    %c0_6 = arith.constant 0 : index
    %c12 = arith.constant 12 : index
    %7 = vector.load %arg2[%c0_6, %c12] : memref<2x24xf32, #tpu.memory_space<vmem>>, vector<2x12xf32>
    tpu.vector_store %arg2[%c0_6, %c12], %6 {strides = array<i32>} : memref<2x24xf32, #tpu.memory_space<vmem>>, vector<2x12xf32>,
    return
  }
}

</mosaic_0001>

<llo_original>
// kernel: tpu_custom_call.1
$region0: #{tpu_custom_call.1}
  #allocation0 [shape = 'u32[]', space=smem, size = 0x4, offset = 0x4, fixed_abs, tag = 'smem constant byte address 0x4 - core index']
  #allocation1 [shape = 'u32[144,128]{1,0:T(1,128)}', space=vmem, size = 0x12000, scoped, tag = 'internal scratch']
  %s0 = inlined_call_operand.hbm [shape: f32[2,12], index: 0, kind: input, shape index: {}]
  %s1 = inlined_call_operand.vmem [shape: f32[2,12], index: 1, kind: input, shape index: {}]
  %s2 = inlined_call_operand.hbm [shape: f32[2,24], index: 2, kind: output, shape index: {}]
  %s3 = sld [smem:[#allocation0]]
  $region22: #{tpu_custom_call.1} parent=0
    _
  %s5 = ssub.s32 1, %s3
  %s6 = scalar_select 0, %s5, %s3
  $region1: #{tpu_custom_call.1} parent=0
    #allocation2 [shape = 'u8[1024]{0}', space=vmem, size = 0x400, scoped, tag = 'input window, operand 0, single buffered']
    #allocation3 [shape = 's32[1]{0}', space=sflag, size = 0x4, scoped, tag = 'scoped memory for tpu_custom_call.1']
    #allocation4 [shape = 's32[1]{0}', space=sflag, size = 0x4, scoped, tag = 'scoped memory for tpu_custom_call.1']
    #allocation5 [shape = 'u8[1024]{0}', space=vmem, size = 0x400, scoped, tag = 'output window, operand 0, single buffered']
    %7 = vsyncpa [#allocation3], 0
    %8 = vsyncpa [#allocation4], 0
    // Predicated region
    $region2: #{tpu_custom_call.1} parent=1 // pred_check
      _
    $region3: #{tpu_custom_call.1} parent=1 // pred_check_branch
      %10 = sbr.rel (0) target = $region5
    $region4: #{tpu_custom_call.1} parent=1 // pred_region
      %s12 = ssub.s32 32, 32
      %13 = vsyncadd [#allocation3], %s12
      %s15 = sshll.u32 [#allocation2], 4
      %s16 = int_to_ptr.vmem [resolvable:$true] %s15
      %18 = dma.hbm_to_vmem [thread:$0]  %s0, 32, %s16, [#allocation3]
    $region5: #{tpu_custom_call.1} parent=1 // pred_fallthru
      _
    // Predicated region
    $region6: #{tpu_custom_call.1} parent=1 // pred_check
      _
    $region7: #{tpu_custom_call.1} parent=1 // pred_check_branch
      %20 = sbr.rel (0) target = $region9
    $region8: #{tpu_custom_call.1} parent=1 // pred_region
      _
    $region9: #{tpu_custom_call.1} parent=1 // pred_fallthru
      _
    // Predicated region
    $region10: #{tpu_custom_call.1} parent=1 // pred_check
      _
    $region11: #{tpu_custom_call.1} parent=1 // pred_check_branch
      %22 = sbr.rel (0) target = $region13
    $region12: #{tpu_custom_call.1} parent=1 // pred_region
      %23 = dma.done [#allocation3], 32
    $region13: #{tpu_custom_call.1} parent=1 // pred_fallthru
      _
    %v24 = vld [vmem:[#allocation2] sm:$0x3]
    %v25 = vmax.f32 %v24, 0.0
    %vm26 = vcmask 91136
    %27 = vst.msk [vmem:[#allocation5] sm:$0x3] %vm26, %v25
    %v28 = vld [vmem:[%s1] sm:$0x3]
    %v29 = vmax.f32 %v28, 0.0
    %31 = vrot.lane.b32.xlu0 %v29, 12
    %v32 = vpop.permute.xlu0 %31
    %vm34 = vcmask 189536
    %35 = vst.msk [vmem:[#allocation5] sm:$0x3] %vm34, %v32
    // Predicated region
    $region14: #{tpu_custom_call.1} parent=1 // pred_check
      _
    $region15: #{tpu_custom_call.1} parent=1 // pred_check_branch
      %37 = sbr.rel (0) target = $region17
    $region16: #{tpu_custom_call.1} parent=1 // pred_region
      %s39 = ssub.s32 32, 32
      %40 = vsyncadd [#allocation4], %s39
      %s42 = sshll.u32 [#allocation5], 4
      %s43 = int_to_ptr.vmem [resolvable:$true] %s42
      %45 = dma.vmem_to_hbm [thread:$0]  %s43, 32, %s2, [#allocation4]
    $region17: #{tpu_custom_call.1} parent=1 // pred_fallthru
      _
    // Predicated region
    $region18: #{tpu_custom_call.1} parent=1 // pred_check
      _
    $region19: #{tpu_custom_call.1} parent=1 // pred_check_branch
      %47 = sbr.rel (0) target = $region21
    $region20: #{tpu_custom_call.1} parent=1 // pred_region
      %48 = dma.done [#allocation4], 32
    $region21: #{tpu_custom_call.1} parent=1 // pred_fallthru
      _
    %49 = vsyncpa [#allocation3], 1
    %50 = vsyncpa [#allocation4], 1

</llo_original>
